<compile_context>
chip_gen: v6e
topology: v6e:2x2x1
jax: 0.10.0
libtpu: 0.0.40
codegen_flags: <defaults>
</compile_context>

<pallas_src>
import jax
import jax.numpy as jnp
from jax.experimental import pallas as pl
from jax.experimental.pallas import tpu as pltpu


def _make_ffcoref_kernel(tanh_dtype):
    def ffcoref_kernel(x_ref, w1_ref, aux_ref, o_ref):
        # x_ref  : (F, TB)  f32  one lane-dense block of candidate feature columns
        # w1_ref : (H, F)   f32  layer-1 weights (resident: same block every step)
        # aux_ref: (H, 3)   f32  packed [b1 | w2 | b2] (b2 replicated down column 2)
        # o_ref  : (1, TB)  f32  lane-dense score row
        x = x_ref[...]
        w1 = w1_ref[...]
        aux = aux_ref[...]
        b1 = aux[:, 0:1]        # (H, 1)
        w2 = aux[:, 1:2]        # (H, 1)
        b2 = aux[0:1, 2:3]      # (1, 1)

        # ---- Layer 1 on the MXU: (H, F) @ (F, TB) -> (H, TB), f32 accumulate ----
        pre = jnp.dot(w1, x,
                      preferred_element_type=jnp.float32,
                      precision=jax.lax.Precision.HIGHEST)
        pre = pre + b1                                    # VPU add (lane broadcast)

        # ---- tanh on the EUP (optionally bf16 on v6e/v7x for ~2x EUP rate) ------
        h = jnp.tanh(pre.astype(tanh_dtype)).astype(jnp.float32)

        # ---- Layer 2: 32 MACs/candidate -> VPU mul + XLU sublane reduce ---------
        scores = jnp.sum(h * w2, axis=0, keepdims=True) + b2   # (1, TB)
        o_ref[...] = scores.astype(o_ref.dtype)

    return ffcoref_kernel


def _choose_block_b(B, max_block=2048):
    """Pick the lane-block width for the candidate batch axis.

    B <= 128: one exact full-extent block (no raggedness, single grid step).
    B  > 128: multiples of 128 lanes, capped at max_block, sized so the
              'parallel' grid axis has >= 2 steps (v7x has 2 TensorCores/chip).
    """
    if B <= 128:
        return B
    half = -(-B // 2)                    # cdiv(B, 2)
    bb = -(-half // 128) * 128           # round up to a 128-lane multiple
    return max(128, min(max_block, bb))


def make_ffcoref_forward(w1, b1, w2, b2, *, max_block_b=2048,
                         tanh_dtype=jnp.float32):
    """Build a jitted forward over a feature-major candidate batch.

    w1: (H, F), b1: (H,), w2: (1, H), b2: (1,).
    Returned fn maps x_fb of shape (F, B) -> scores of shape (1, B)
    (matching score_instance's 1 x (i+1) layout; B=1 reproduces forward()).
    """
    H, F = w1.shape
    # Hoisted one-time layout work: W1 stays standalone (clean MXU operand);
    # b1 / w2 / b2 are packed into a single small resident aux tensor.
    w1_f = jnp.asarray(w1, jnp.float32)                               # (H, F)
    b2_col = jnp.broadcast_to(
        jnp.asarray(b2, jnp.float32).reshape(1, 1), (H, 1))
    aux = jnp.concatenate(
        [jnp.asarray(b1, jnp.float32).reshape(H, 1),
         jnp.asarray(w2, jnp.float32).reshape(H, 1),
         b2_col], axis=1)                                             # (H, 3)

    kernel = _make_ffcoref_kernel(tanh_dtype)

    @jax.jit
    def forward(x_fb):
        Fx, B = x_fb.shape
        assert Fx == F, "feature dimension mismatch"
        block_b = _choose_block_b(B, max_block_b)     # static under jit (shape-derived)
        grid = (pl.cdiv(B, block_b),)

        return pl.pallas_call(
            kernel,
            out_shape=jax.ShapeDtypeStruct((1, B), jnp.float32),
            grid=grid,
            in_specs=[
                pl.BlockSpec((F, block_b), lambda i: (0, i)),   # x block (lane-dense B)
                pl.BlockSpec((H, F), lambda i: (0, 0)),         # W1, resident
                pl.BlockSpec((H, 3), lambda i: (0, 0)),         # [b1|w2|b2], resident
            ],
            out_specs=pl.BlockSpec((1, block_b), lambda i: (0, i)),  # lane-dense scores
            compiler_params=pltpu.CompilerParams(
                dimension_semantics=("parallel",)),
        )(x_fb.astype(jnp.float32), w1_f, aux)

    return forward


def ffcoref_reference(x_fb, w1, b1, w2, b2):
    """Exact f32 pure-JAX reference (elementwise, no matmul-precision ambiguity)."""
    pre = (w1[:, :, None] * x_fb[None, :, :]).sum(axis=1) + b1[:, None]   # (H, B)
    h = jnp.tanh(pre)
    return (w2.reshape(-1)[:, None] * h).sum(axis=0, keepdims=True) \
        + jnp.asarray(b2, jnp.float32).reshape(1, 1)                      # (1, B)


if __name__ == "__main__":
    # Module config consistent with a coref feature set.
    feat_names = [
        "exact-match", "last-token-match", "content-match",
        "crossover", "same-type", "nested", "distance", "new-entity",
    ]
    num_feats = len(feat_names)   # F = 8
    hidden_dim = 32               # H = 32

    key = jax.random.PRNGKey(0)
    k1, k2, k3, k4, kx1, kx2 = jax.random.split(key, 6)

    # PyTorch-Linear-style init: U(-1/sqrt(fan_in), 1/sqrt(fan_in)).
    bound1 = 1.0 / jnp.sqrt(jnp.float32(num_feats))
    bound2 = 1.0 / jnp.sqrt(jnp.float32(hidden_dim))
    w1 = jax.random.uniform(k1, (hidden_dim, num_feats), jnp.float32, -bound1, bound1)
    b1 = jax.random.uniform(k2, (hidden_dim,), jnp.float32, -bound1, bound1)
    w2 = jax.random.uniform(k3, (1, hidden_dim), jnp.float32, -bound2, bound2)
    b2 = jax.random.uniform(k4, (1,), jnp.float32, -bound2, bound2)

    forward = make_ffcoref_forward(w1, b1, w2, b2)

    # B=8: one exact block (== score_instance of a small markable).
    # B=200: two ragged 128-lane blocks, exercises masked writeback + the
    #        2-step "parallel" B axis (both v7x TensorCores busy).
    for B, kx in ((8, kx1), (200, kx2)):
        # Synthetic 0/1 pairwise-matching feature columns (feature-major layout).
        x_fb = (jax.random.uniform(kx, (num_feats, B), jnp.float32) > 0.5
                ).astype(jnp.float32)
        out = jax.block_until_ready(forward(x_fb))
        ref = ffcoref_reference(x_fb, w1, b1, w2, b2)
        assert out.shape == (1, B), out.shape
        assert jnp.allclose(out, ref, atol=1e-5, rtol=1e-5), (B, out, ref)

    print("KERNEL_OK")
</pallas_src>

<mosaic_0001>
module attributes {stable_mosaic.version = 11 : i64} {
  func.func @ffcoref_kernel(%arg0: i32, %arg1: memref<8x8xf32, #tpu.memory_space<vmem>>, %arg2: memref<32x8xf32, #tpu.memory_space<vmem>>, %arg3: memref<32x3xf32, #tpu.memory_space<vmem>>, %arg4: memref<1x8xf32, #tpu.memory_space<vmem>>) attributes {dimension_semantics = [#tpu.dimension_semantics<parallel>], iteration_bounds = array<i64: 1>, scalar_prefetch = 0 : i64, scratch_operands = 0 : i64, tpu.core_type = #tpu.core_type<tc>, window_params = [{transform_indices = @transform_0, window_bounds = array<i64: 8, 8>}, {pipeline_mode = #tpu.pipeline_mode<synchronous>, transform_indices = @transform_1, window_bounds = array<i64: 32, 8>}, {pipeline_mode = #tpu.pipeline_mode<synchronous>, transform_indices = @transform_2, window_bounds = array<i64: 32, 3>}, {transform_indices = @transform_3, window_bounds = array<i64: 1, 8>}]} {
    %c0 = arith.constant 0 : index
    %c0_0 = arith.constant 0 : index
    %0 = vector.load %arg1[%c0, %c0_0] : memref<8x8xf32, #tpu.memory_space<vmem>>, vector<8x8xf32>
    %c0_1 = arith.constant 0 : index
    %c0_2 = arith.constant 0 : index
    %1 = vector.load %arg2[%c0_1, %c0_2] : memref<32x8xf32, #tpu.memory_space<vmem>>, vector<32x8xf32>
    %c0_3 = arith.constant 0 : index
    %c0_4 = arith.constant 0 : index
    %2 = vector.load %arg3[%c0_3, %c0_4] : memref<32x3xf32, #tpu.memory_space<vmem>>, vector<32x3xf32>
    %3 = vector.extract_strided_slice %2 {offsets = [0, 0], sizes = [32, 1], strides = [1, 1]} : vector<32x3xf32> to vector<32x1xf32>
    %4 = vector.extract_strided_slice %2 {offsets = [0, 1], sizes = [32, 1], strides = [1, 1]} : vector<32x3xf32> to vector<32x1xf32>
    %5 = vector.extract_strided_slice %2 {offsets = [0, 2], sizes = [1, 1], strides = [1, 1]} : vector<32x3xf32> to vector<1x1xf32>
    %cst = arith.constant dense<0.000000e+00> : vector<32x8xf32>
    %6 = tpu.matmul %1, %0, %cst {dimension_numbers = #tpu.dot_dimension_numbers<[1], [0], [0], [1], [0, 0, 1, 1], [], []>, precision = #tpu.contract_precision<fp32>} : vector<32x8xf32>, vector<8x8xf32>, vector<32x8xf32> -> vector<32x8xf32>
    %7 = vector.broadcast %3 : vector<32x1xf32> to vector<32x8xf32>
    %8 = arith.addf %6, %7 : vector<32x8xf32>
    %9 = math.tanh %8 : vector<32x8xf32>
    %10 = vector.broadcast %4 : vector<32x1xf32> to vector<32x8xf32>
    %11 = arith.mulf %9, %10 : vector<32x8xf32>
    %cst_5 = arith.constant dense<0.000000e+00> : vector<8xf32>
    %12 = vector.multi_reduction <add>, %11, %cst_5 [0] : vector<32x8xf32> to vector<8xf32>
    %13 = vector.shape_cast %12 : vector<8xf32> to vector<1x8xf32>
    %14 = vector.broadcast %5 : vector<1x1xf32> to vector<1x8xf32>
    %15 = arith.addf %13, %14 : vector<1x8xf32>
    %c0_6 = arith.constant 0 : index
    %c0_7 = arith.constant 0 : index
    %16 = vector.load %arg4[%c0_6, %c0_7] : memref<1x8xf32, #tpu.memory_space<vmem>>, vector<1x8xf32>
    tpu.vector_store %arg4[%c0_6, %c0_7], %15 {strides = array<i32>} : memref<1x8xf32, #tpu.memory_space<vmem>>, vector<1x8xf32>,
    return
  }
  func.func @transform_0(%arg0: i32) -> (i32, i32) {
    %c0_i32 = arith.constant 0 : i32
    %c0_i32_0 = arith.constant 0 : i32
    return %c0_i32, %arg0 : i32, i32
  }
  func.func @transform_1(%arg0: i32) -> (i32, i32) {
    %c0_i32 = arith.constant 0 : i32
    %c0_i32_0 = arith.constant 0 : i32
    %c0_i32_1 = arith.constant 0 : i32
    return %c0_i32, %c0_i32_0 : i32, i32
  }
  func.func @transform_2(%arg0: i32) -> (i32, i32) {
    %c0_i32 = arith.constant 0 : i32
    %c0_i32_0 = arith.constant 0 : i32
    %c0_i32_1 = arith.constant 0 : i32
    return %c0_i32, %c0_i32_0 : i32, i32
  }
  func.func @transform_3(%arg0: i32) -> (i32, i32) {
    %c0_i32 = arith.constant 0 : i32
    %c0_i32_0 = arith.constant 0 : i32
    return %c0_i32, %arg0 : i32, i32
  }
}

</mosaic_0001>

<llo_original>
// kernel: forward.1
$region0: #{forward.1}
  #allocation0 [shape = 'u32[]', space=smem, size = 0x4, offset = 0x4, fixed_abs, tag = 'smem constant byte address 0x4 - core index']
  #allocation1 [shape = 'u32[144,128]{1,0:T(1,128)}', space=vmem, size = 0x12000, scoped, tag = 'internal scratch']
  %s0 = inlined_call_operand.hbm [shape: f32[8,8], index: 0, kind: input, shape index: {}]
  %s1 = inlined_call_operand.hbm [shape: f32[32,8], index: 1, kind: input, shape index: {}]
  %s2 = inlined_call_operand.hbm [shape: f32[32,3], index: 2, kind: input, shape index: {}]
  %s3 = inlined_call_operand.hbm [shape: f32[1,8], index: 3, kind: output, shape index: {}]
  %s4 = sld [smem:[#allocation0]]
  $region34: #{forward.1} parent=0
    _
  %s6 = ssub.s32 1, %s4
  %s7 = scalar_select 0, %s6, %s4
  $region1: #{forward.1} parent=0
    #allocation2 [shape = 'u8[4096]{0}', space=vmem, size = 0x1000, scoped, tag = 'input window, operand 0, single buffered']
    #allocation3 [shape = 's32[1]{0}', space=sflag, size = 0x4, scoped, tag = 'scoped memory for forward.1']
    #allocation4 [shape = 's32[1]{0}', space=sflag, size = 0x4, scoped, tag = 'scoped memory for forward.1']
    #allocation5 [shape = 'u8[16384]{0}', space=vmem, size = 0x4000, scoped, tag = 'input window, operand 1, single buffered']
    #allocation6 [shape = 's32[1]{0}', space=sflag, size = 0x4, scoped, tag = 'scoped memory for forward.1']
    #allocation7 [shape = 'u8[16384]{0}', space=vmem, size = 0x4000, scoped, tag = 'input window, operand 2, single buffered']
    #allocation8 [shape = 'u8[512]{0}', space=vmem, size = 0x400, scoped, tag = 'output window, operand 0, single buffered']
    %8 = vsyncpa [#allocation3], 0
    %9 = vsyncpa [#allocation6], 0
    %10 = vsyncpa [#allocation4], 0
    // Predicated region
    $region2: #{forward.1} parent=1 // pred_check
      _
    $region3: #{forward.1} parent=1 // pred_check_branch
      %12 = sbr.rel (0) target = $region5
    $region4: #{forward.1} parent=1 // pred_region
      %s14 = ssub.s32 128, 128
      %15 = vsyncadd [#allocation3], %s14
      %s17 = sshll.u32 [#allocation2], 4
      %s18 = int_to_ptr.vmem [resolvable:$true] %s17
      %20 = dma.hbm_to_vmem [thread:$0]  %s0, 128, %s18, [#allocation3]
    $region5: #{forward.1} parent=1 // pred_fallthru
      _
    // Predicated region
    $region6: #{forward.1} parent=1 // pred_check
      _
    $region7: #{forward.1} parent=1 // pred_check_branch
      %22 = sbr.rel (0) target = $region9
    $region8: #{forward.1} parent=1 // pred_region
      %s24 = ssub.s32 512, 512
      %25 = vsyncadd [#allocation6], %s24
      %s26 = sshll.u32 [#allocation5], 4
      %s27 = int_to_ptr.vmem [resolvable:$true] %s26
      %32 = dma.hbm_to_vmem [thread:$0]  %s1, 512, %s27, [#allocation6], 128, 128, 8
    $region9: #{forward.1} parent=1 // pred_fallthru
      _
    // Predicated region
    $region10: #{forward.1} parent=1 // pred_check
      _
    $region11: #{forward.1} parent=1 // pred_check_branch
      %34 = sbr.rel (0) target = $region13
    $region12: #{forward.1} parent=1 // pred_region
      %s36 = ssub.s32 512, 512
      %37 = vsyncadd [#allocation6], %s36
      %s38 = sshll.u32 [#allocation7], 4
      %s39 = int_to_ptr.vmem [resolvable:$true] %s38
      %44 = dma.hbm_to_vmem [thread:$0]  %s2, 512, %s39, [#allocation6], 128, 128, 8
    $region13: #{forward.1} parent=1 // pred_fallthru
      _
    // Predicated region
    $region14: #{forward.1} parent=1 // pred_check
      _
    $region15: #{forward.1} parent=1 // pred_check_branch
      %46 = sbr.rel (0) target = $region17
    $region16: #{forward.1} parent=1 // pred_region
      %47 = dma.done [#allocation3], 128
    $region17: #{forward.1} parent=1 // pred_fallthru
      _
    // Predicated region
    $region18: #{forward.1} parent=1 // pred_check
      _
    $region19: #{forward.1} parent=1 // pred_check_branch
      %49 = sbr.rel (0) target = $region21
    $region20: #{forward.1} parent=1 // pred_region
      %50 = dma.done [#allocation6], 512
    $region21: #{forward.1} parent=1 // pred_fallthru
      _
    // Predicated region
    $region22: #{forward.1} parent=1 // pred_check
      _
    $region23: #{forward.1} parent=1 // pred_check_branch
      %52 = sbr.rel (0) target = $region25
    $region24: #{forward.1} parent=1 // pred_region
      %53 = dma.done [#allocation6], 512
    $region25: #{forward.1} parent=1 // pred_fallthru
      _
    %v54 = vld [vmem:[#allocation2] sm:$0xff]
    %v55 = vld [vmem:[#allocation5] sm:$0xff]
    %v56 = vld [vmem:[#allocation5 + $0x8] sm:$0xff]
    %v57 = vld [vmem:[#allocation5 + $0x10] sm:$0xff]
    %v58 = vld [vmem:[#allocation5 + $0x18] sm:$0xff]
    %v59 = vld [vmem:[#allocation7] sm:$0xff]
    %v60 = vld [vmem:[#allocation7 + $0x8] sm:$0xff]
    %v61 = vld [vmem:[#allocation7 + $0x10] sm:$0xff]
    %v62 = vld [vmem:[#allocation7 + $0x18] sm:$0xff]
    %64 = vset.pattern.permute.xlu0 0
    %65 = vperm.xlu0 %64, %v59
    %v66 = vpop.permute.xlu0 %65
    %69 = vset.pattern.permute.xlu0 0
    %70 = vperm.xlu0 %69, %v60
    %v71 = vpop.permute.xlu0 %70
    %74 = vset.pattern.permute.xlu0 0
    %75 = vperm.xlu0 %74, %v61
    %v76 = vpop.permute.xlu0 %75
    %79 = vset.pattern.permute.xlu0 0
    %80 = vperm.xlu0 %79, %v62
    %v81 = vpop.permute.xlu0 %80
    %vm83 = vcmask 64512
    %v85 = vsel %vm83, %v55, 0
    %v88 = vsel %vm83, %v56, 0
    %v91 = vsel %vm83, %v57, 0
    %v94 = vsel %vm83, %v58, 0
    %96 = vmatprep.subr.mxu0 0.0
    %97 = vmatpush1.msra.mxu0 0.0
    %98 = vmatprep.subr.mxu0 0.0
    %99 = vmatpush1.msra.mxu0 0.0
    %100 = vmatprep.subr.mxu0 0.0
    %101 = vmatpush1.msra.mxu0 0.0
    %102 = vmatprep.subr.mxu0 0.0
    %103 = vmatpush1.msra.mxu0 0.0
    %104 = vmatprep.subr.mxu0 0.0
    %105 = vmatpush1.msra.mxu0 0.0
    %106 = vmatprep.subr.mxu0 0.0
    %107 = vmatpush1.msra.mxu0 0.0
    %108 = vmatprep.subr.mxu0 0.0
    %109 = vmatpush1.msra.mxu0 0.0
    %110 = vmatprep.subr.mxu0 0.0
    %111 = vmatpush1.msra.mxu0 0.0
    %112 = vmatprep.subr.mxu0 0.0
    %113 = vmatpush1.msra.mxu0 0.0
    %114 = vmatprep.subr.mxu0 0.0
    %115 = vmatpush1.msra.mxu0 0.0
    %116 = vmatprep.subr.mxu0 0.0
    %117 = vmatpush1.msra.mxu0 0.0
    %118 = vmatprep.subr.mxu0 0.0
    %119 = vmatpush1.msra.mxu0 0.0
    %120 = vmatprep.subr.mxu0 0.0
    %121 = vmatpush1.msra.mxu0 0.0
    %122 = vmatprep.subr.mxu0 0.0
    %123 = vmatpush1.msra.mxu0 0.0
    %124 = vmatprep.subr.mxu0 0.0
    %125 = vmatpush1.msra.mxu0 0.0
    %126 = vmatprep.subr.mxu0 0.0
    %v127 = vand.u32 %v54, 4294901760
    %128 = vmatpush1.msra.mxu0 %v127
    %129 = vmatprep.subr.mxu0 0.0
    %130 = vmatpush2.msra.mxu0 0.0
    %131 = vmatprep.subr.mxu0 0.0
    %132 = vmatpush2.msra.mxu0 0.0
    %133 = vmatprep.subr.mxu0 0.0
    %134 = vmatpush2.msra.mxu0 0.0
    %135 = vmatprep.subr.mxu0 0.0
    %136 = vmatpush2.msra.mxu0 0.0
    %137 = vmatprep.subr.mxu0 0.0
    %138 = vmatpush2.msra.mxu0 0.0
    %139 = vmatprep.subr.mxu0 0.0
    %140 = vmatpush2.msra.mxu0 0.0
    %141 = vmatprep.subr.mxu0 0.0
    %142 = vmatpush2.msra.mxu0 0.0
    %143 = vmatprep.subr.mxu0 0.0
    %144 = vmatpush2.msra.mxu0 0.0
    %145 = vmatprep.subr.mxu0 0.0
    %146 = vmatpush2.msra.mxu0 0.0
    %147 = vmatprep.subr.mxu0 0.0
    %148 = vmatpush2.msra.mxu0 0.0
    %149 = vmatprep.subr.mxu0 0.0
    %150 = vmatpush2.msra.mxu0 0.0
    %151 = vmatprep.subr.mxu0 0.0
    %152 = vmatpush2.msra.mxu0 0.0
    %153 = vmatprep.subr.mxu0 0.0
    %154 = vmatpush2.msra.mxu0 0.0
    %155 = vmatprep.subr.mxu0 0.0
    %156 = vmatpush2.msra.mxu0 0.0
    %157 = vmatprep.subr.mxu0 0.0
    %158 = vmatpush2.msra.mxu0 0.0
    %159 = vmatprep.subr.mxu0 0.0
    %160 = vmatpush2.msra.mxu0 0.0
    %161 = vmatprep.mubr.f32.mxu0 0.0
    %v162 = vand.u32 %v85, 4294901760
    %v163 = vsub.f32 %v85, %v162
    %v164 = vand.u32 %v163, 4294901760
    %v165 = vsub.f32 %v163, %v164
    %v166 = vand.u32 %v165, 4294901760
    %167 = vmatmul.mubr.f32.gmra.mxu0 %v166
    %v168 = vpop.f32.mrf.mxu0
    %v169 = vadd.f32 %v66, %v168
    %v170 = vpop.f32.mrf.mxu0
    %171 = vmatprep.mubr.f32.mxu0 0.0
    %v172 = vand.u32 %v88, 4294901760
    %v173 = vsub.f32 %v88, %v172
    %v174 = vand.u32 %v173, 4294901760
    %v175 = vsub.f32 %v173, %v174
    %v176 = vand.u32 %v175, 4294901760
    %177 = vmatmul.mubr.f32.gmra.mxu0 %v176
    %v178 = vpop.f32.mrf.mxu0
    %v179 = vadd.f32 %v71, %v178
    %v180 = vpop.f32.mrf.mxu0
    %181 = vmatprep.mubr.f32.mxu0 0.0
    %v182 = vand.u32 %v91, 4294901760
    %v183 = vsub.f32 %v91, %v182
    %v184 = vand.u32 %v183, 4294901760
    %v185 = vsub.f32 %v183, %v184
    %v186 = vand.u32 %v185, 4294901760
    %187 = vmatmul.mubr.f32.gmra.mxu0 %v186
    %v188 = vpop.f32.mrf.mxu0
    %v189 = vadd.f32 %v76, %v188
    %v190 = vpop.f32.mrf.mxu0
    %191 = vmatprep.mubr.f32.mxu0 0.0
    %v192 = vand.u32 %v94, 4294901760
    %v193 = vsub.f32 %v94, %v192
    %v194 = vand.u32 %v193, 4294901760
    %v195 = vsub.f32 %v193, %v194
    %v196 = vand.u32 %v195, 4294901760
    %197 = vmatmul.mubr.f32.gmra.mxu0 %v196
    %v198 = vpop.f32.mrf.mxu0
    %v199 = vadd.f32 %v81, %v198
    %v200 = vpop.f32.mrf.mxu0
    %201 = vdwg.mxu0
    %202 = vmatprep.subr.mxu0 0.0
    %203 = vmatpush1.msra.mxu0 0.0
    %204 = vmatprep.subr.mxu0 0.0
    %205 = vmatpush1.msra.mxu0 0.0
    %206 = vmatprep.subr.mxu0 0.0
    %207 = vmatpush1.msra.mxu0 0.0
    %208 = vmatprep.subr.mxu0 0.0
    %209 = vmatpush1.msra.mxu0 0.0
    %210 = vmatprep.subr.mxu0 0.0
    %211 = vmatpush1.msra.mxu0 0.0
    %212 = vmatprep.subr.mxu0 0.0
    %213 = vmatpush1.msra.mxu0 0.0
    %214 = vmatprep.subr.mxu0 0.0
    %215 = vmatpush1.msra.mxu0 0.0
    %216 = vmatprep.subr.mxu0 0.0
    %217 = vmatpush1.msra.mxu0 0.0
    %218 = vmatprep.subr.mxu0 0.0
    %219 = vmatpush1.msra.mxu0 0.0
    %220 = vmatprep.subr.mxu0 0.0
    %221 = vmatpush1.msra.mxu0 0.0
    %222 = vmatprep.subr.mxu0 0.0
    %223 = vmatpush1.msra.mxu0 0.0
    %224 = vmatprep.subr.mxu0 0.0
    %225 = vmatpush1.msra.mxu0 0.0
    %226 = vmatprep.subr.mxu0 0.0
    %227 = vmatpush1.msra.mxu0 0.0
    %228 = vmatprep.subr.mxu0 0.0
    %229 = vmatpush1.msra.mxu0 0.0
    %230 = vmatprep.subr.mxu0 0.0
    %231 = vmatpush1.msra.mxu0 0.0
    %232 = vmatprep.subr.mxu0 0.0
    %v233 = vand.u32 %v54, 4294901760
    %v234 = vsub.f32 %v54, %v233
    %v235 = vand.u32 %v234, 4294901760
    %v236 = vsub.f32 %v234, %v235
    %v237 = vand.u32 %v236, 4294901760
    %238 = vmatpush1.msra.mxu0 %v237
    %239 = vmatprep.subr.mxu0 0.0
    %240 = vmatpush2.msra.mxu0 0.0
    %241 = vmatprep.subr.mxu0 0.0
    %242 = vmatpush2.msra.mxu0 0.0
    %243 = vmatprep.subr.mxu0 0.0
    %244 = vmatpush2.msra.mxu0 0.0
    %245 = vmatprep.subr.mxu0 0.0
    %246 = vmatpush2.msra.mxu0 0.0
    %247 = vmatprep.subr.mxu0 0.0
    %248 = vmatpush2.msra.mxu0 0.0
    %249 = vmatprep.subr.mxu0 0.0
    %250 = vmatpush2.msra.mxu0 0.0
    %251 = vmatprep.subr.mxu0 0.0
    %252 = vmatpush2.msra.mxu0 0.0
    %253 = vmatprep.subr.mxu0 0.0
    %254 = vmatpush2.msra.mxu0 0.0
    %255 = vmatprep.subr.mxu0 0.0
    %256 = vmatpush2.msra.mxu0 0.0
    %257 = vmatprep.subr.mxu0 0.0
    %258 = vmatpush2.msra.mxu0 0.0
    %259 = vmatprep.subr.mxu0 0.0
    %260 = vmatpush2.msra.mxu0 0.0
    %261 = vmatprep.subr.mxu0 0.0
    %262 = vmatpush2.msra.mxu0 0.0
    %263 = vmatprep.subr.mxu0 0.0
    %264 = vmatpush2.msra.mxu0 0.0
    %265 = vmatprep.subr.mxu0 0.0
    %266 = vmatpush2.msra.mxu0 0.0
    %267 = vmatprep.subr.mxu0 0.0
    %268 = vmatpush2.msra.mxu0 0.0
    %269 = vmatprep.subr.mxu0 0.0
    %270 = vmatpush2.msra.mxu0 0.0
    %271 = vmatprep.mubr.f32.mxu0 0.0
    %v272 = vand.u32 %v85, 4294901760
    %273 = vmatmul.mubr.f32.gmra.mxu0 %v272
    %v274 = vpop.f32.mrf.mxu0
    %v275 = vadd.f32 %v169, %v274
    %v276 = vpop.f32.mrf.mxu0
    %277 = vmatprep.mubr.f32.mxu0 0.0
    %v278 = vand.u32 %v88, 4294901760
    %279 = vmatmul.mubr.f32.gmra.mxu0 %v278
    %v280 = vpop.f32.mrf.mxu0
    %v281 = vadd.f32 %v179, %v280
    %v282 = vpop.f32.mrf.mxu0
    %283 = vmatprep.mubr.f32.mxu0 0.0
    %v284 = vand.u32 %v91, 4294901760
    %285 = vmatmul.mubr.f32.gmra.mxu0 %v284
    %v286 = vpop.f32.mrf.mxu0
    %v287 = vadd.f32 %v189, %v286
    %v288 = vpop.f32.mrf.mxu0
    %289 = vmatprep.mubr.f32.mxu0 0.0
    %v290 = vand.u32 %v94, 4294901760
    %291 = vmatmul.mubr.f32.gmra.mxu0 %v290
    %v292 = vpop.f32.mrf.mxu0
    %v293 = vadd.f32 %v199, %v292
    %v294 = vpop.f32.mrf.mxu0
    %295 = vdwg.mxu0
    %296 = vmatprep.subr.mxu0 0.0
    %297 = vmatpush1.msra.mxu0 0.0
    %298 = vmatprep.subr.mxu0 0.0
    %299 = vmatpush1.msra.mxu0 0.0
    %300 = vmatprep.subr.mxu0 0.0
    %301 = vmatpush1.msra.mxu0 0.0
    %302 = vmatprep.subr.mxu0 0.0
    %303 = vmatpush1.msra.mxu0 0.0
    %304 = vmatprep.subr.mxu0 0.0
    %305 = vmatpush1.msra.mxu0 0.0
    %306 = vmatprep.subr.mxu0 0.0
    %307 = vmatpush1.msra.mxu0 0.0
    %308 = vmatprep.subr.mxu0 0.0
    %309 = vmatpush1.msra.mxu0 0.0
    %310 = vmatprep.subr.mxu0 0.0
    %311 = vmatpush1.msra.mxu0 0.0
    %312 = vmatprep.subr.mxu0 0.0
    %313 = vmatpush1.msra.mxu0 0.0
    %314 = vmatprep.subr.mxu0 0.0
    %315 = vmatpush1.msra.mxu0 0.0
    %316 = vmatprep.subr.mxu0 0.0
    %317 = vmatpush1.msra.mxu0 0.0
    %318 = vmatprep.subr.mxu0 0.0
    %319 = vmatpush1.msra.mxu0 0.0
    %320 = vmatprep.subr.mxu0 0.0
    %321 = vmatpush1.msra.mxu0 0.0
    %322 = vmatprep.subr.mxu0 0.0
    %323 = vmatpush1.msra.mxu0 0.0
    %324 = vmatprep.subr.mxu0 0.0
    %325 = vmatpush1.msra.mxu0 0.0
    %326 = vmatprep.subr.mxu0 0.0
    %v327 = vand.u32 %v54, 4294901760
    %v328 = vsub.f32 %v54, %v327
    %329 = vmatpush1.msra.mxu0 %v328
    %330 = vmatprep.subr.mxu0 0.0
    %331 = vmatpush2.msra.mxu0 0.0
    %332 = vmatprep.subr.mxu0 0.0
    %333 = vmatpush2.msra.mxu0 0.0
    %334 = vmatprep.subr.mxu0 0.0
    %335 = vmatpush2.msra.mxu0 0.0
    %336 = vmatprep.subr.mxu0 0.0
    %337 = vmatpush2.msra.mxu0 0.0
    %338 = vmatprep.subr.mxu0 0.0
    %339 = vmatpush2.msra.mxu0 0.0
    %340 = vmatprep.subr.mxu0 0.0
    %341 = vmatpush2.msra.mxu0 0.0
    %342 = vmatprep.subr.mxu0 0.0
    %343 = vmatpush2.msra.mxu0 0.0
    %344 = vmatprep.subr.mxu0 0.0
    %345 = vmatpush2.msra.mxu0 0.0
    %346 = vmatprep.subr.mxu0 0.0
    %347 = vmatpush2.msra.mxu0 0.0
    %348 = vmatprep.subr.mxu0 0.0
    %349 = vmatpush2.msra.mxu0 0.0
    %350 = vmatprep.subr.mxu0 0.0
    %351 = vmatpush2.msra.mxu0 0.0
    %352 = vmatprep.subr.mxu0 0.0
    %353 = vmatpush2.msra.mxu0 0.0
    %354 = vmatprep.subr.mxu0 0.0
    %355 = vmatpush2.msra.mxu0 0.0
    %356 = vmatprep.subr.mxu0 0.0
    %357 = vmatpush2.msra.mxu0 0.0
    %358 = vmatprep.subr.mxu0 0.0
    %359 = vmatpush2.msra.mxu0 0.0
    %360 = vmatprep.subr.mxu0 0.0
    %361 = vmatpush2.msra.mxu0 0.0
    %362 = vmatprep.mubr.f32.mxu0 0.0
    %v363 = vand.u32 %v85, 4294901760
    %v364 = vsub.f32 %v85, %v363
    %365 = vmatmul.mubr.f32.gmra.mxu0 %v364
    %v366 = vpop.f32.mrf.mxu0
    %v367 = vadd.f32 %v275, %v366
    %v368 = vpop.f32.mrf.mxu0
    %369 = vmatprep.mubr.f32.mxu0 0.0
    %v370 = vand.u32 %v88, 4294901760
    %v371 = vsub.f32 %v88, %v370
    %372 = vmatmul.mubr.f32.gmra.mxu0 %v371
    %v373 = vpop.f32.mrf.mxu0
    %v374 = vadd.f32 %v281, %v373
    %v375 = vpop.f32.mrf.mxu0
    %376 = vmatprep.mubr.f32.mxu0 0.0
    %v377 = vand.u32 %v91, 4294901760
    %v378 = vsub.f32 %v91, %v377
    %379 = vmatmul.mubr.f32.gmra.mxu0 %v378
    %v380 = vpop.f32.mrf.mxu0
    %v381 = vadd.f32 %v287, %v380
    %v382 = vpop.f32.mrf.mxu0
    %383 = vmatprep.mubr.f32.mxu0 0.0
    %v384 = vand.u32 %v94, 4294901760
    %v385 = vsub.f32 %v94, %v384
    %386 = vmatmul.mubr.f32.gmra.mxu0 %v385
    %v387 = vpop.f32.mrf.mxu0
    %v388 = vadd.f32 %v293, %v387
    %v389 = vpop.f32.mrf.mxu0
    %390 = vdwg.mxu0
    %391 = vmatprep.subr.mxu0 0.0
    %392 = vmatpush1.msra.mxu0 0.0
    %393 = vmatprep.subr.mxu0 0.0
    %394 = vmatpush1.msra.mxu0 0.0
    %395 = vmatprep.subr.mxu0 0.0
    %396 = vmatpush1.msra.mxu0 0.0
    %397 = vmatprep.subr.mxu0 0.0
    %398 = vmatpush1.msra.mxu0 0.0
    %399 = vmatprep.subr.mxu0 0.0
    %400 = vmatpush1.msra.mxu0 0.0
    %401 = vmatprep.subr.mxu0 0.0
    %402 = vmatpush1.msra.mxu0 0.0
    %403 = vmatprep.subr.mxu0 0.0
    %404 = vmatpush1.msra.mxu0 0.0
    %405 = vmatprep.subr.mxu0 0.0
    %406 = vmatpush1.msra.mxu0 0.0
    %407 = vmatprep.subr.mxu0 0.0
    %408 = vmatpush1.msra.mxu0 0.0
    %409 = vmatprep.subr.mxu0 0.0
    %410 = vmatpush1.msra.mxu0 0.0
    %411 = vmatprep.subr.mxu0 0.0
    %412 = vmatpush1.msra.mxu0 0.0
    %413 = vmatprep.subr.mxu0 0.0
    %414 = vmatpush1.msra.mxu0 0.0
    %415 = vmatprep.subr.mxu0 0.0
    %416 = vmatpush1.msra.mxu0 0.0
    %417 = vmatprep.subr.mxu0 0.0
    %418 = vmatpush1.msra.mxu0 0.0
    %419 = vmatprep.subr.mxu0 0.0
    %420 = vmatpush1.msra.mxu0 0.0
    %421 = vmatprep.subr.mxu0 0.0
    %v422 = vand.u32 %v54, 4294901760
    %423 = vmatpush1.msra.mxu0 %v422
    %424 = vmatprep.subr.mxu0 0.0
    %425 = vmatpush2.msra.mxu0 0.0
    %426 = vmatprep.subr.mxu0 0.0
    %427 = vmatpush2.msra.mxu0 0.0
    %428 = vmatprep.subr.mxu0 0.0
    %429 = vmatpush2.msra.mxu0 0.0
    %430 = vmatprep.subr.mxu0 0.0
    %431 = vmatpush2.msra.mxu0 0.0
    %432 = vmatprep.subr.mxu0 0.0
    %433 = vmatpush2.msra.mxu0 0.0
    %434 = vmatprep.subr.mxu0 0.0
    %435 = vmatpush2.msra.mxu0 0.0
    %436 = vmatprep.subr.mxu0 0.0
    %437 = vmatpush2.msra.mxu0 0.0
    %438 = vmatprep.subr.mxu0 0.0
    %439 = vmatpush2.msra.mxu0 0.0
    %440 = vmatprep.subr.mxu0 0.0
    %441 = vmatpush2.msra.mxu0 0.0
    %442 = vmatprep.subr.mxu0 0.0
    %443 = vmatpush2.msra.mxu0 0.0
    %444 = vmatprep.subr.mxu0 0.0
    %445 = vmatpush2.msra.mxu0 0.0
    %446 = vmatprep.subr.mxu0 0.0
    %447 = vmatpush2.msra.mxu0 0.0
    %448 = vmatprep.subr.mxu0 0.0
    %449 = vmatpush2.msra.mxu0 0.0
    %450 = vmatprep.subr.mxu0 0.0
    %451 = vmatpush2.msra.mxu0 0.0
    %452 = vmatprep.subr.mxu0 0.0
    %453 = vmatpush2.msra.mxu0 0.0
    %454 = vmatprep.subr.mxu0 0.0
    %455 = vmatpush2.msra.mxu0 0.0
    %456 = vmatprep.mubr.f32.mxu0 0.0
    %v457 = vand.u32 %v85, 4294901760
    %v458 = vsub.f32 %v85, %v457
    %v459 = vand.u32 %v458, 4294901760
    %460 = vmatmul.mubr.f32.gmra.mxu0 %v459
    %v461 = vpop.f32.mrf.mxu0
    %v462 = vadd.f32 %v367, %v461
    %v463 = vpop.f32.mrf.mxu0
    %464 = vmatprep.mubr.f32.mxu0 0.0
    %v465 = vand.u32 %v88, 4294901760
    %v466 = vsub.f32 %v88, %v465
    %v467 = vand.u32 %v466, 4294901760
    %468 = vmatmul.mubr.f32.gmra.mxu0 %v467
    %v469 = vpop.f32.mrf.mxu0
    %v470 = vadd.f32 %v374, %v469
    %v471 = vpop.f32.mrf.mxu0
    %472 = vmatprep.mubr.f32.mxu0 0.0
    %v473 = vand.u32 %v91, 4294901760
    %v474 = vsub.f32 %v91, %v473
    %v475 = vand.u32 %v474, 4294901760
    %476 = vmatmul.mubr.f32.gmra.mxu0 %v475
    %v477 = vpop.f32.mrf.mxu0
    %v478 = vadd.f32 %v381, %v477
    %v479 = vpop.f32.mrf.mxu0
    %480 = vmatprep.mubr.f32.mxu0 0.0
    %v481 = vand.u32 %v94, 4294901760
    %v482 = vsub.f32 %v94, %v481
    %v483 = vand.u32 %v482, 4294901760
    %484 = vmatmul.mubr.f32.gmra.mxu0 %v483
    %v485 = vpop.f32.mrf.mxu0
    %v486 = vadd.f32 %v388, %v485
    %v487 = vpop.f32.mrf.mxu0
    %488 = vdwg.mxu0
    %489 = vmatprep.subr.mxu0 0.0
    %490 = vmatpush1.msra.mxu0 0.0
    %491 = vmatprep.subr.mxu0 0.0
    %492 = vmatpush1.msra.mxu0 0.0
    %493 = vmatprep.subr.mxu0 0.0
    %494 = vmatpush1.msra.mxu0 0.0
    %495 = vmatprep.subr.mxu0 0.0
    %496 = vmatpush1.msra.mxu0 0.0
    %497 = vmatprep.subr.mxu0 0.0
    %498 = vmatpush1.msra.mxu0 0.0
    %499 = vmatprep.subr.mxu0 0.0
    %500 = vmatpush1.msra.mxu0 0.0
    %501 = vmatprep.subr.mxu0 0.0
    %502 = vmatpush1.msra.mxu0 0.0
    %503 = vmatprep.subr.mxu0 0.0
    %504 = vmatpush1.msra.mxu0 0.0
    %505 = vmatprep.subr.mxu0 0.0
    %506 = vmatpush1.msra.mxu0 0.0
    %507 = vmatprep.subr.mxu0 0.0
    %508 = vmatpush1.msra.mxu0 0.0
    %509 = vmatprep.subr.mxu0 0.0
    %510 = vmatpush1.msra.mxu0 0.0
    %511 = vmatprep.subr.mxu0 0.0
    %512 = vmatpush1.msra.mxu0 0.0
    %513 = vmatprep.subr.mxu0 0.0
    %514 = vmatpush1.msra.mxu0 0.0
    %515 = vmatprep.subr.mxu0 0.0
    %516 = vmatpush1.msra.mxu0 0.0
    %517 = vmatprep.subr.mxu0 0.0
    %518 = vmatpush1.msra.mxu0 0.0
    %519 = vmatprep.subr.mxu0 0.0
    %v520 = vand.u32 %v54, 4294901760
    %v521 = vsub.f32 %v54, %v520
    %v522 = vand.u32 %v521, 4294901760
    %523 = vmatpush1.msra.mxu0 %v522
    %524 = vmatprep.subr.mxu0 0.0
    %525 = vmatpush2.msra.mxu0 0.0
    %526 = vmatprep.subr.mxu0 0.0
    %527 = vmatpush2.msra.mxu0 0.0
    %528 = vmatprep.subr.mxu0 0.0
    %529 = vmatpush2.msra.mxu0 0.0
    %530 = vmatprep.subr.mxu0 0.0
    %531 = vmatpush2.msra.mxu0 0.0
    %532 = vmatprep.subr.mxu0 0.0
    %533 = vmatpush2.msra.mxu0 0.0
    %534 = vmatprep.subr.mxu0 0.0
    %535 = vmatpush2.msra.mxu0 0.0
    %536 = vmatprep.subr.mxu0 0.0
    %537 = vmatpush2.msra.mxu0 0.0
    %538 = vmatprep.subr.mxu0 0.0
    %539 = vmatpush2.msra.mxu0 0.0
    %540 = vmatprep.subr.mxu0 0.0
    %541 = vmatpush2.msra.mxu0 0.0
    %542 = vmatprep.subr.mxu0 0.0
    %543 = vmatpush2.msra.mxu0 0.0
    %544 = vmatprep.subr.mxu0 0.0
    %545 = vmatpush2.msra.mxu0 0.0
    %546 = vmatprep.subr.mxu0 0.0
    %547 = vmatpush2.msra.mxu0 0.0
    %548 = vmatprep.subr.mxu0 0.0
    %549 = vmatpush2.msra.mxu0 0.0
    %550 = vmatprep.subr.mxu0 0.0
    %551 = vmatpush2.msra.mxu0 0.0
    %552 = vmatprep.subr.mxu0 0.0
    %553 = vmatpush2.msra.mxu0 0.0
    %554 = vmatprep.subr.mxu0 0.0
    %555 = vmatpush2.msra.mxu0 0.0
    %556 = vmatprep.mubr.f32.mxu0 0.0
    %v557 = vand.u32 %v85, 4294901760
    %558 = vmatmul.mubr.f32.gmra.mxu0 %v557
    %v559 = vpop.f32.mrf.mxu0
    %v560 = vadd.f32 %v462, %v559
    %v561 = vpop.f32.mrf.mxu0
    %562 = vmatprep.mubr.f32.mxu0 0.0
    %v563 = vand.u32 %v88, 4294901760
    %564 = vmatmul.mubr.f32.gmra.mxu0 %v563
    %v565 = vpop.f32.mrf.mxu0
    %v566 = vadd.f32 %v470, %v565
    %v567 = vpop.f32.mrf.mxu0
    %568 = vmatprep.mubr.f32.mxu0 0.0
    %v569 = vand.u32 %v91, 4294901760
    %570 = vmatmul.mubr.f32.gmra.mxu0 %v569
    %v571 = vpop.f32.mrf.mxu0
    %v572 = vadd.f32 %v478, %v571
    %v573 = vpop.f32.mrf.mxu0
    %574 = vmatprep.mubr.f32.mxu0 0.0
    %v575 = vand.u32 %v94, 4294901760
    %576 = vmatmul.mubr.f32.gmra.mxu0 %v575
    %v577 = vpop.f32.mrf.mxu0
    %v578 = vadd.f32 %v486, %v577
    %v579 = vpop.f32.mrf.mxu0
    %580 = vdwg.mxu0
    %581 = vmatprep.subr.mxu0 0.0
    %582 = vmatpush1.msra.mxu0 0.0
    %583 = vmatprep.subr.mxu0 0.0
    %584 = vmatpush1.msra.mxu0 0.0
    %585 = vmatprep.subr.mxu0 0.0
    %586 = vmatpush1.msra.mxu0 0.0
    %587 = vmatprep.subr.mxu0 0.0
    %588 = vmatpush1.msra.mxu0 0.0
    %589 = vmatprep.subr.mxu0 0.0
    %590 = vmatpush1.msra.mxu0 0.0
    %591 = vmatprep.subr.mxu0 0.0
    %592 = vmatpush1.msra.mxu0 0.0
    %593 = vmatprep.subr.mxu0 0.0
    %594 = vmatpush1.msra.mxu0 0.0
    %595 = vmatprep.subr.mxu0 0.0
    %596 = vmatpush1.msra.mxu0 0.0
    %597 = vmatprep.subr.mxu0 0.0
    %598 = vmatpush1.msra.mxu0 0.0
    %599 = vmatprep.subr.mxu0 0.0
    %600 = vmatpush1.msra.mxu0 0.0
    %601 = vmatprep.subr.mxu0 0.0
    %602 = vmatpush1.msra.mxu0 0.0
    %603 = vmatprep.subr.mxu0 0.0
    %604 = vmatpush1.msra.mxu0 0.0
    %605 = vmatprep.subr.mxu0 0.0
    %606 = vmatpush1.msra.mxu0 0.0
    %607 = vmatprep.subr.mxu0 0.0
    %608 = vmatpush1.msra.mxu0 0.0
    %609 = vmatprep.subr.mxu0 0.0
    %610 = vmatpush1.msra.mxu0 0.0
    %611 = vmatprep.subr.mxu0 0.0
    %v612 = vand.u32 %v54, 4294901760
    %613 = vmatpush1.msra.mxu0 %v612
    %614 = vmatprep.subr.mxu0 0.0
    %615 = vmatpush2.msra.mxu0 0.0
    %616 = vmatprep.subr.mxu0 0.0
    %617 = vmatpush2.msra.mxu0 0.0
    %618 = vmatprep.subr.mxu0 0.0
    %619 = vmatpush2.msra.mxu0 0.0
    %620 = vmatprep.subr.mxu0 0.0
    %621 = vmatpush2.msra.mxu0 0.0
    %622 = vmatprep.subr.mxu0 0.0
    %623 = vmatpush2.msra.mxu0 0.0
    %624 = vmatprep.subr.mxu0 0.0
    %625 = vmatpush2.msra.mxu0 0.0
    %626 = vmatprep.subr.mxu0 0.0
    %627 = vmatpush2.msra.mxu0 0.0
    %628 = vmatprep.subr.mxu0 0.0
    %629 = vmatpush2.msra.mxu0 0.0
    %630 = vmatprep.subr.mxu0 0.0
    %631 = vmatpush2.msra.mxu0 0.0
    %632 = vmatprep.subr.mxu0 0.0
    %633 = vmatpush2.msra.mxu0 0.0
    %634 = vmatprep.subr.mxu0 0.0
    %635 = vmatpush2.msra.mxu0 0.0
    %636 = vmatprep.subr.mxu0 0.0
    %637 = vmatpush2.msra.mxu0 0.0
    %638 = vmatprep.subr.mxu0 0.0
    %639 = vmatpush2.msra.mxu0 0.0
    %640 = vmatprep.subr.mxu0 0.0
    %641 = vmatpush2.msra.mxu0 0.0
    %642 = vmatprep.subr.mxu0 0.0
    %643 = vmatpush2.msra.mxu0 0.0
    %644 = vmatprep.subr.mxu0 0.0
    %645 = vmatpush2.msra.mxu0 0.0
    %646 = vmatprep.mubr.f32.mxu0 0.0
    %v647 = vand.u32 %v85, 4294901760
    %648 = vmatmul.mubr.f32.gmra.mxu0 %v647
    %v649 = vpop.f32.mrf.mxu0
    %v650 = vadd.f32 %v560, %v649
    %v651 = vpop.f32.mrf.mxu0
    %652 = vmatprep.mubr.f32.mxu0 0.0
    %v653 = vand.u32 %v88, 4294901760
    %654 = vmatmul.mubr.f32.gmra.mxu0 %v653
    %v655 = vpop.f32.mrf.mxu0
    %v656 = vadd.f32 %v566, %v655
    %v657 = vpop.f32.mrf.mxu0
    %658 = vmatprep.mubr.f32.mxu0 0.0
    %v659 = vand.u32 %v91, 4294901760
    %660 = vmatmul.mubr.f32.gmra.mxu0 %v659
    %v661 = vpop.f32.mrf.mxu0
    %v662 = vadd.f32 %v572, %v661
    %v663 = vpop.f32.mrf.mxu0
    %664 = vmatprep.mubr.f32.mxu0 0.0
    %v665 = vand.u32 %v94, 4294901760
    %666 = vmatmul.mubr.f32.gmra.mxu0 %v665
    %v667 = vpop.f32.mrf.mxu0
    %v668 = vadd.f32 %v578, %v667
    %v669 = vpop.f32.mrf.mxu0
    %670 = vdwg.mxu0
    %v671 = vtanh.pop %v650
    %v672 = vtanh.pop %v656
    %v673 = vtanh.pop %v662
    %v674 = vtanh.pop %v668
    %675 = vset.pattern.permute.xlu0 1
    %676 = vperm.xlu0 %675, %v59
    %v677 = vpop.permute.xlu0 %676
    %679 = vset.pattern.permute.xlu0 1
    %680 = vperm.xlu0 %679, %v60
    %v681 = vpop.permute.xlu0 %680
    %683 = vset.pattern.permute.xlu0 1
    %684 = vperm.xlu0 %683, %v61
    %v685 = vpop.permute.xlu0 %684
    %687 = vset.pattern.permute.xlu0 1
    %688 = vperm.xlu0 %687, %v62
    %v689 = vpop.permute.xlu0 %688
    %v691 = vmul.f32 %v671, %v677
    %v692 = vmul.f32 %v672, %v681
    %v693 = vmul.f32 %v673, %v685
    %v694 = vmul.f32 %v674, %v689
    %v695 = vsel %vm83, %v691, 0.0
    %v696 = vsel %vm83, %v692, 0.0
    %v697 = vadd.f32 %v695, %v696
    %v698 = vsel %vm83, %v693, 0.0
    %v699 = vadd.f32 %v697, %v698
    %v700 = vsel %vm83, %v694, 0.0
    %v701 = vadd.f32 %v699, %v700
    %v702 = vrot.slane %v701, 4
    %v703 = vadd.f32 %v701, %v702
    %v704 = vrot.slane %v703, 2
    %v705 = vadd.f32 %v703, %v704
    %v706 = vrot.slane %v705, 1
    %v707 = vadd.f32 %v705, %v706
    %708 = vset.pattern.permute.xlu0 2
    %709 = vperm.xlu0 %708, %v59
    %v710 = vpop.permute.xlu0 %709
    %v712 = vadd.f32 %v707, %v710
    %vm713 = vcmask 57344
    %714 = vst.msk [vmem:[#allocation8] sm:$0x1] %vm713, %v712
    // Predicated region
    $region26: #{forward.1} parent=1 // pred_check
      _
    $region27: #{forward.1} parent=1 // pred_check_branch
      %716 = sbr.rel (0) target = $region29
    $region28: #{forward.1} parent=1 // pred_region
      %s718 = ssub.s32 16, 16
      %719 = vsyncadd [#allocation4], %s718
      %s721 = sshll.u32 [#allocation8], 4
      %s722 = int_to_ptr.vmem [resolvable:$true] %s721
      %724 = dma.vmem_to_hbm [thread:$0]  %s722, 16, %s3, [#allocation4]
    $region29: #{forward.1} parent=1 // pred_fallthru
      _
    // Predicated region
    $region30: #{forward.1} parent=1 // pred_check
      _
    $region31: #{forward.1} parent=1 // pred_check_branch
      %726 = sbr.rel (0) target = $region33
    $region32: #{forward.1} parent=1 // pred_region
      %727 = dma.done [#allocation4], 16
    $region33: #{forward.1} parent=1 // pred_fallthru
      _
    %728 = vsyncpa [#allocation3], 1
    %729 = vsyncpa [#allocation6], 1
    %730 = vsyncpa [#allocation4], 1

</llo_original>
